<compile_context>
chip_gen: v6e
topology: v6e:2x2x1
jax: 0.10.0
libtpu: 0.0.40
codegen_flags: <defaults>
</compile_context>

<pallas_src>
import functools

import jax
import jax.numpy as jnp
from jax import lax
from jax.experimental import pallas as pl
from jax.experimental.pallas import tpu as pltpu


def _tile128(w):
    return ((w + 127) // 128) * 128


def _slab_layout(F, H, R, L, N):
    """Lane-tile-aligned offsets shared by pack_params / pack_inputs / the kernel."""
    adj_off = _tile128(2 * F)
    eps_off = adj_off + _tile128(N)
    data_w = eps_off + _tile128(L)
    lat_off = _tile128(2 * H + 2)
    mv_off = lat_off + _tile128(R)
    w_cols = mv_off + _tile128(2 * L)
    w_rows = ((max(2 * F, 2 * H, R) + 7) // 8) * 8
    out_w = _tile128(3 * L)
    return dict(adj_off=adj_off, eps_off=eps_off, data_w=data_w,
                lat_off=lat_off, mv_off=mv_off, w_cols=w_cols, w_rows=w_rows,
                out_w=out_w)


def _node_encoder_kernel(data_ref, w_ref, b_ref, out_ref, *,
                         F, H, R, L, N, adj_off, eps_off, lat_off, mv_off, out_w):
    # ---- one lane-packed data slab per graph: [x | pos] / adj / eps ---------
    data = data_ref[0]                                   # (N, data_w)
    xp = data[:, 0:2 * F]                                # [x | pos]   (N, 2F)
    adj = data[:, adj_off:adj_off + N]                   # (N, N)
    eps = data[:, eps_off:eps_off + L]                   # (N, L)

    # ---- static views into the packed parameter slabs -----------------------
    w_proj = w_ref[0:2 * F, 0:2 * H + 2]                 # block RHS [[Wf,Wg,c1,c2],[0,Wg,c1,c2]]
    w_lat = w_ref[0:2 * H, lat_off:lat_off + R]          # latent_encode.W (2H, R)
    w_mv = w_ref[0:R, mv_off:mv_off + 2 * L]             # [W_mean | W_lv] (R, 2L)

    b_feat = b_ref[0:1, 0:H]                             # (1, H)
    b_lat = b_ref[1:2, 0:R]                              # (1, R)
    b_mv = b_ref[2:3, 0:2 * L]                           # (1, 2L) = [b_mean | b_lv]

    # ---- ONE fused MXU push: feat_pre | Wh | s1 | s2 -------------------------
    proj = jnp.dot(xp, w_proj, preferred_element_type=jnp.float32)   # (N, 2H+2)
    feat = jnp.maximum(proj[:, 0:H] + b_feat, 0.0)                   # relu(x@W_feat + b)
    wh = proj[:, H:2 * H]                                            # (x+pos) @ W_gat
    s1 = proj[:, 2 * H:2 * H + 1]                                    # (N,1) = Wh @ a[:H]
    s2c = proj[:, 2 * H + 1:2 * H + 2]                               # (N,1) = Wh @ a[H:]

    # Column -> row "transpose" with XLU-only ops (diag mask + sublane reduce).
    eye = (lax.broadcasted_iota(jnp.int32, (N, N), 0) ==
           lax.broadcasted_iota(jnp.int32, (N, N), 1))
    s2r = jnp.sum(jnp.where(eye, s2c, 0.0), axis=0, keepdims=True)   # (1, N)

    # ---- GAT attention: LeakyReLU, zero-fill non-edges, DENSE row softmax ----
    e = s1 + s2r                                                     # (N, N)
    e = jnp.where(e > 0, e, 0.2 * e)                                 # LeakyReLU(0.2)
    att = jnp.where(adj != 0.0, e, 0.0)
    m = jnp.max(att, axis=1, keepdims=True)
    p = jnp.exp(att - m)
    inv = pl.reciprocal(jnp.sum(p, axis=1, keepdims=True), approx=True)
    att = p * inv
    # TODO(synk): F.dropout(attention, p=0.6) omitted (eval-mode semantics).

    nb = jnp.maximum(
        jnp.dot(att, wh, preferred_element_type=jnp.float32), 0.0)   # (N, H)

    # ---- latent = relu(latent_encode(cat([feat, nb], 1))) — one MXU push -----
    lat_in = jnp.concatenate([feat, nb], axis=1)                     # (N, 2H)
    lat = jnp.dot(lat_in, w_lat, preferred_element_type=jnp.float32) + b_lat
    lat = jnp.maximum(lat, 0.0)                                      # (N, R)

    # ---- mean | log_var fused into one matmul, then reparameterize -----------
    mv = jnp.dot(lat, w_mv, preferred_element_type=jnp.float32) + b_mv   # (N, 2L)
    mean = mv[:, 0:L]
    log_var = mv[:, L:2 * L]
    z = mean + eps * jnp.exp(0.5 * log_var)                          # (N, L)

    # ---- single lane-dense output slab: [z | mean | log_var | zeros] ---------
    pad = jnp.zeros((N, out_w - 3 * L), jnp.float32)
    out_ref[0] = jnp.concatenate([z, mv, pad], axis=1)               # (N, out_w)


def pack_params(params, N):
    """Pack the 12 parameter tensors into two lane-tile-aligned slabs (host-side, once)."""
    w_feat, w_gat = params["w_feat"], params["w_gat"]
    w_lat, w_mean, w_lv = params["w_lat"], params["w_mean"], params["w_lv"]
    a = params["a"]                                       # (2H, 1)
    F, H = w_feat.shape
    R = w_lat.shape[1]
    L = w_mean.shape[1]
    lay = _slab_layout(F, H, R, L, N)

    # Layout invariants: each segment fits its own 128-lane tile(s) and row extent.
    assert 2 * H + 2 <= lay["lat_off"], "fused-projection columns overlap w_lat segment"
    assert R <= lay["mv_off"] - lay["lat_off"], "w_lat columns overlap w_mean/w_lv segment"
    assert 2 * L <= lay["w_cols"] - lay["mv_off"], "w_mean/w_lv columns exceed slab"
    assert lay["w_rows"] >= max(2 * F, 2 * H, R), "weight slab rows too small"
    assert max(H, R, 2 * L) <= 128 and 3 * L <= lay["out_w"]

    # Folded attention-vector projections (associativity: (Wh)@a == (x+pos)@(W_gat@a)).
    c1 = w_gat @ a[0:H]                                   # (F, 1)
    c2 = w_gat @ a[H:2 * H]                               # (F, 1)

    w_all = jnp.zeros((lay["w_rows"], lay["w_cols"]), jnp.float32)
    # Segment A: block RHS for the fused input projection, LHS = [x | pos].
    w_all = w_all.at[0:F, 0:H].set(w_feat)                # x @ W_feat (pos rows stay 0)
    w_all = w_all.at[0:F, H:2 * H].set(w_gat)             # (x+pos) @ W_gat
    w_all = w_all.at[F:2 * F, H:2 * H].set(w_gat)
    w_all = w_all.at[0:F, 2 * H:2 * H + 1].set(c1)        # s1 column
    w_all = w_all.at[F:2 * F, 2 * H:2 * H + 1].set(c1)
    w_all = w_all.at[0:F, 2 * H + 1:2 * H + 2].set(c2)    # s2 column
    w_all = w_all.at[F:2 * F, 2 * H + 1:2 * H + 2].set(c2)
    # Segment B: latent_encode weight.
    w_all = w_all.at[0:2 * H, lay["lat_off"]:lay["lat_off"] + R].set(w_lat)
    # Segment C: [W_mean | W_lv].
    w_all = w_all.at[0:R, lay["mv_off"]:lay["mv_off"] + L].set(w_mean)
    w_all = w_all.at[0:R, lay["mv_off"] + L:lay["mv_off"] + 2 * L].set(w_lv)

    b_all = jnp.zeros((8, 128), jnp.float32)
    b_all = b_all.at[0, 0:H].set(params["b_feat"].reshape(-1))
    b_all = b_all.at[1, 0:R].set(params["b_lat"].reshape(-1))
    b_all = b_all.at[2, 0:L].set(params["b_mean"].reshape(-1))
    b_all = b_all.at[2, L:2 * L].set(params["b_lv"].reshape(-1))
    return w_all, b_all, (F, H, R, L)


def pack_inputs(x, pos_emb, normalized_adj, eps, lay):
    """Lane-pack the four runtime inputs into one (B, N, data_w) slab (3 DMAs total)."""
    B, N, F = x.shape
    L = eps.shape[-1]
    assert 2 * F <= lay["adj_off"] and N <= lay["eps_off"] - lay["adj_off"]
    assert L <= lay["data_w"] - lay["eps_off"]
    data = jnp.zeros((B, N, lay["data_w"]), jnp.float32)
    data = data.at[:, :, 0:F].set(x)
    data = data.at[:, :, F:2 * F].set(pos_emb)
    data = data.at[:, :, lay["adj_off"]:lay["adj_off"] + N].set(normalized_adj)
    data = data.at[:, :, lay["eps_off"]:lay["eps_off"] + L].set(eps)
    return data


def node_encoder_forward(x, normalized_adj, pos_emb, eps, w_all, b_all, dims):
    """Batched forward: x/pos (B,N,F), adj (B,N,N), eps (B,N,L). Each graph is independent."""
    F, H, R, L = dims
    B, N, _ = x.shape
    lay = _slab_layout(F, H, R, L, N)
    data = pack_inputs(x, pos_emb, normalized_adj, eps, lay)

    kernel = functools.partial(
        _node_encoder_kernel, F=F, H=H, R=R, L=L, N=N,
        adj_off=lay["adj_off"], eps_off=lay["eps_off"],
        lat_off=lay["lat_off"], mv_off=lay["mv_off"], out_w=lay["out_w"])

    flops = B * (2 * N * (2 * F) * (2 * H + 2) + 2 * N * N * H
                 + 2 * N * (2 * H) * R + 2 * N * R * (2 * L))
    transcendentals = B * (N * N + N * L + N)
    bytes_accessed = 4 * (B * N * lay["data_w"] + lay["w_rows"] * lay["w_cols"]
                          + 8 * 128 + B * N * lay["out_w"])

    out = pl.pallas_call(
        kernel,
        out_shape=jax.ShapeDtypeStruct((B, N, lay["out_w"]), jnp.float32),
        grid_spec=pltpu.PrefetchScalarGridSpec(
            num_scalar_prefetch=0,
            grid=(B,),
            in_specs=[
                pl.BlockSpec((1, N, lay["data_w"]), lambda b: (b, 0, 0)),
                pl.BlockSpec((lay["w_rows"], lay["w_cols"]), lambda b: (0, 0)),
                pl.BlockSpec((8, 128), lambda b: (0, 0)),
            ],
            out_specs=pl.BlockSpec((1, N, lay["out_w"]), lambda b: (b, 0, 0)),
        ),
        compiler_params=pltpu.CompilerParams(dimension_semantics=("parallel",)),
        cost_estimate=pl.CostEstimate(flops=int(flops),
                                      transcendentals=int(transcendentals),
                                      bytes_accessed=int(bytes_accessed)),
    )(data, w_all, b_all)
    return out[:, :, 0:L], out[:, :, L:2 * L], out[:, :, 2 * L:3 * L]


# ---------------------------------------------------------------------------
# Pure-JAX reference (mirrors the PyTorch forward, single graph) + demo.
# ---------------------------------------------------------------------------
def node_encoder_ref(x, normalized_adj, pos_emb, params, eps):
    H = params["w_feat"].shape[1]
    feat = jax.nn.relu(x @ params["w_feat"] + params["b_feat"])
    wh = (x + pos_emb) @ params["w_gat"]
    s1 = wh @ params["a"][:H]                        # (N, 1)
    s2 = wh @ params["a"][H:]                        # (N, 1)
    e = jax.nn.leaky_relu(s1 + s2.T, negative_slope=0.2)
    att = jnp.where(normalized_adj != 0.0, e, 0.0)
    att = jax.nn.softmax(att, axis=1)
    nb = jax.nn.relu(att @ wh)
    lat = jax.nn.relu(jnp.concatenate([feat, nb], axis=1) @ params["w_lat"] + params["b_lat"])
    mean = lat @ params["w_mean"] + params["b_mean"]
    log_var = lat @ params["w_lv"] + params["b_lv"]
    z = mean + eps * jnp.exp(0.5 * log_var)
    return z, mean, log_var


def _xavier_uniform(key, shape, gain=1.0):
    fan_in, fan_out = shape[0], shape[1]
    limit = gain * (6.0 / (fan_in + fan_out)) ** 0.5
    return jax.random.uniform(key, shape, jnp.float32, -limit, limit)


def _bias(key, fan_in, out_dim):
    limit = 1.0 / (fan_in ** 0.5)
    return jax.random.uniform(key, (1, out_dim), jnp.float32, -limit, limit)


if __name__ == "__main__":
    # Small shapes consistent with the module: B graphs, N nodes each.
    B, N, feat_dim, hidden_dim, reparam_dim, latent_dim = 2, 16, 32, 16, 16, 8

    key = jax.random.PRNGKey(0)
    keys = jax.random.split(key, 16)

    # Inputs (batched: one independent graph per leading index)
    x = jax.random.normal(keys[0], (B, N, feat_dim), jnp.float32)
    pos_emb = jax.random.normal(keys[1], (B, N, feat_dim), jnp.float32)
    A = jax.random.bernoulli(keys[2], 0.3, (B, N, N)).astype(jnp.float32)
    A = jnp.maximum(A, jnp.eye(N, dtype=jnp.float32)[None])          # self-loops
    normalized_adj = A / jnp.sum(A, axis=2, keepdims=True)           # row-normalized adjacency

    # Parameters (deterministic init; shapes follow the PyTorch __init__)
    params = {
        "w_feat": _xavier_uniform(keys[3], (feat_dim, hidden_dim)),            # feat_encode
        "b_feat": _bias(keys[4], feat_dim, hidden_dim),
        "w_gat": _xavier_uniform(keys[5], (feat_dim, hidden_dim), gain=1.414), # GAT W
        "a": _xavier_uniform(keys[6], (2 * hidden_dim, 1), gain=1.414),        # GAT a
        "w_lat": _xavier_uniform(keys[7], (2 * hidden_dim, reparam_dim)),      # latent_encode
        "b_lat": _bias(keys[8], 2 * hidden_dim, reparam_dim),
        "w_mean": _xavier_uniform(keys[9], (reparam_dim, latent_dim)),
        "b_mean": _bias(keys[10], reparam_dim, latent_dim),
        "w_lv": _xavier_uniform(keys[11], (reparam_dim, latent_dim)),
        "b_lv": _bias(keys[12], reparam_dim, latent_dim),
    }

    # eps ~ N(0, 1) for the reparameterization trick (generated outside, passed in)
    eps = jax.random.normal(keys[13], (B, N, latent_dim), jnp.float32)

    w_all, b_all, dims = pack_params(params, N)
    z, mean, log_var = node_encoder_forward(x, normalized_adj, pos_emb, eps, w_all, b_all, dims)
    jax.block_until_ready((z, mean, log_var))

    assert z.shape == (B, N, latent_dim)
    assert mean.shape == (B, N, latent_dim)
    assert log_var.shape == (B, N, latent_dim)

    # Correctness check against the pure-JAX reference (per-graph, vmapped).
    ref_fn = lambda xg, ag, pg, eg: node_encoder_ref(xg, ag, pg, params, eg)
    z_r, mean_r, lv_r = jax.vmap(ref_fn)(x, normalized_adj, pos_emb, eps)
    ok = (jnp.allclose(z, z_r, atol=2e-2, rtol=2e-2)
          & jnp.allclose(mean, mean_r, atol=2e-2, rtol=2e-2)
          & jnp.allclose(log_var, lv_r, atol=2e-2, rtol=2e-2))
    assert bool(ok), "Pallas kernel does not match JAX reference"

    print("KERNEL_OK")
</pallas_src>

<mosaic_0001>
module attributes {stable_mosaic.version = 11 : i64} {
  func.func @_node_encoder_kernel(%arg0: i32, %arg1: memref<1x16x384xf32, #tpu.memory_space<vmem>>, %arg2: memref<64x384xf32, #tpu.memory_space<vmem>>, %arg3: memref<8x128xf32, #tpu.memory_space<vmem>>, %arg4: memref<1x16x128xf32, #tpu.memory_space<vmem>>) attributes {dimension_semantics = [#tpu.dimension_semantics<parallel>], iteration_bounds = array<i64: 2>, scalar_prefetch = 0 : i64, scratch_operands = 0 : i64, tpu.core_type = #tpu.core_type<tc>, window_params = [{transform_indices = @transform_0, window_bounds = array<i64: 1, 16, 384>}, {pipeline_mode = #tpu.pipeline_mode<synchronous>, transform_indices = @transform_1, window_bounds = array<i64: 64, 384>}, {pipeline_mode = #tpu.pipeline_mode<synchronous>, transform_indices = @transform_2, window_bounds = array<i64: 8, 128>}, {transform_indices = @transform_3, window_bounds = array<i64: 1, 16, 128>}]} {
    %c0 = arith.constant 0 : index
    %c0_0 = arith.constant 0 : index
    %c0_1 = arith.constant 0 : index
    %0 = vector.load %arg1[%c0, %c0_0, %c0_1] : memref<1x16x384xf32, #tpu.memory_space<vmem>>, vector<1x16x384xf32>
    %1 = vector.shape_cast %0 : vector<1x16x384xf32> to vector<16x384xf32>
    %2 = vector.extract_strided_slice %1 {offsets = [0, 0], sizes = [16, 64], strides = [1, 1]} : vector<16x384xf32> to vector<16x64xf32>
    %3 = vector.extract_strided_slice %1 {offsets = [0, 128], sizes = [16, 16], strides = [1, 1]} : vector<16x384xf32> to vector<16x16xf32>
    %4 = vector.extract_strided_slice %1 {offsets = [0, 256], sizes = [16, 8], strides = [1, 1]} : vector<16x384xf32> to vector<16x8xf32>
    %c0_2 = arith.constant 0 : index
    %c0_3 = arith.constant 0 : index
    %5 = vector.load %arg2[%c0_2, %c0_3] : memref<64x384xf32, #tpu.memory_space<vmem>>, vector<64x34xf32>
    %c0_4 = arith.constant 0 : index
    %c128 = arith.constant 128 : index
    %6 = vector.load %arg2[%c0_4, %c128] : memref<64x384xf32, #tpu.memory_space<vmem>>, vector<32x16xf32>
    %c0_5 = arith.constant 0 : index
    %c256 = arith.constant 256 : index
    %7 = vector.load %arg2[%c0_5, %c256] : memref<64x384xf32, #tpu.memory_space<vmem>>, vector<16x16xf32>
    %c0_6 = arith.constant 0 : index
    %c0_7 = arith.constant 0 : index
    %8 = vector.load %arg3[%c0_6, %c0_7] : memref<8x128xf32, #tpu.memory_space<vmem>>, vector<1x16xf32>
    %c1 = arith.constant 1 : index
    %c0_8 = arith.constant 0 : index
    %9 = vector.load %arg3[%c1, %c0_8] : memref<8x128xf32, #tpu.memory_space<vmem>>, vector<1x16xf32>
    %c2 = arith.constant 2 : index
    %c0_9 = arith.constant 0 : index
    %10 = vector.load %arg3[%c2, %c0_9] : memref<8x128xf32, #tpu.memory_space<vmem>>, vector<1x16xf32>
    %cst = arith.constant dense<0.000000e+00> : vector<16x34xf32>
    %11 = tpu.matmul %2, %5, %cst {dimension_numbers = #tpu.dot_dimension_numbers<[1], [0], [0], [1], [0, 0, 1, 1], [], []>} : vector<16x64xf32>, vector<64x34xf32>, vector<16x34xf32> -> vector<16x34xf32>
    %12 = vector.extract_strided_slice %11 {offsets = [0, 0], sizes = [16, 16], strides = [1, 1]} : vector<16x34xf32> to vector<16x16xf32>
    %13 = vector.broadcast %8 : vector<1x16xf32> to vector<16x16xf32>
    %14 = arith.addf %12, %13 : vector<16x16xf32>
    %cst_10 = arith.constant 0.000000e+00 : f32
    %15 = vector.broadcast %cst_10 : f32 to vector<16x16xf32>
    %16 = arith.maximumf %14, %15 : vector<16x16xf32>
    %17 = vector.extract_strided_slice %11 {offsets = [0, 16], sizes = [16, 16], strides = [1, 1]} : vector<16x34xf32> to vector<16x16xf32>
    %18 = vector.extract_strided_slice %11 {offsets = [0, 32], sizes = [16, 1], strides = [1, 1]} : vector<16x34xf32> to vector<16x1xf32>
    %19 = vector.extract_strided_slice %11 {offsets = [0, 33], sizes = [16, 1], strides = [1, 1]} : vector<16x34xf32> to vector<16x1xf32>
    %20 = tpu.iota {dimensions = array<i32: 0>} : vector<16x16xi32>
    %21 = tpu.iota {dimensions = array<i32: 1>} : vector<16x16xi32>
    %22 = arith.cmpi eq, %20, %21 : vector<16x16xi32>
    %cst_11 = arith.constant 0.000000e+00 : f32
    %23 = vector.shape_cast %19 : vector<16x1xf32> to vector<16x1xf32>
    %24 = vector.broadcast %23 : vector<16x1xf32> to vector<16x16xf32>
    %25 = vector.broadcast %cst_11 : f32 to vector<16x16xf32>
    %26 = arith.select %22, %24, %25 : vector<16x16xi1>, vector<16x16xf32>
    %cst_12 = arith.constant dense<0.000000e+00> : vector<16xf32>
    %27 = vector.multi_reduction <add>, %26, %cst_12 [0] : vector<16x16xf32> to vector<16xf32>
    %28 = vector.shape_cast %27 : vector<16xf32> to vector<1x16xf32>
    %29 = vector.broadcast %18 : vector<16x1xf32> to vector<16x16xf32>
    %30 = vector.broadcast %28 : vector<1x16xf32> to vector<16x16xf32>
    %31 = arith.addf %29, %30 : vector<16x16xf32>
    %cst_13 = arith.constant 0.000000e+00 : f32
    %32 = vector.broadcast %cst_13 : f32 to vector<16x16xf32>
    %33 = arith.cmpf ogt, %31, %32 : vector<16x16xf32>
    %cst_14 = arith.constant 2.000000e-01 : f32
    %34 = vector.broadcast %cst_14 : f32 to vector<16x16xf32>
    %35 = arith.mulf %34, %31 : vector<16x16xf32>
    %36 = arith.select %33, %31, %35 : vector<16x16xi1>, vector<16x16xf32>
    %cst_15 = arith.constant 0.000000e+00 : f32
    %37 = vector.broadcast %cst_15 : f32 to vector<16x16xf32>
    %38 = arith.cmpf one, %3, %37 : vector<16x16xf32>
    %cst_16 = arith.constant 0.000000e+00 : f32
    %39 = vector.broadcast %cst_16 : f32 to vector<16x16xf32>
    %40 = arith.select %38, %36, %39 : vector<16x16xi1>, vector<16x16xf32>
    %cst_17 = arith.constant dense<0xFF800000> : vector<16xf32>
    %41 = vector.multi_reduction <maximumf>, %40, %cst_17 [1] : vector<16x16xf32> to vector<16xf32>
    %42 = vector.shape_cast %41 : vector<16xf32> to vector<16x1xf32>
    %43 = vector.broadcast %42 : vector<16x1xf32> to vector<16x16xf32>
    %44 = arith.subf %40, %43 : vector<16x16xf32>
    %45 = math.exp %44 : vector<16x16xf32>
    %cst_18 = arith.constant dense<0.000000e+00> : vector<16xf32>
    %46 = vector.multi_reduction <add>, %45, %cst_18 [1] : vector<16x16xf32> to vector<16xf32>
    %47 = vector.shape_cast %46 : vector<16xf32> to vector<16x1xf32>
    %48 = tpu.reciprocal %47 {approx = true} : vector<16x1xf32> -> vector<16x1xf32>
    %49 = vector.broadcast %48 : vector<16x1xf32> to vector<16x16xf32>
    %50 = arith.mulf %45, %49 : vector<16x16xf32>
    %cst_19 = arith.constant dense<0.000000e+00> : vector<16x16xf32>
    %51 = tpu.matmul %50, %17, %cst_19 {dimension_numbers = #tpu.dot_dimension_numbers<[1], [0], [0], [1], [0, 0, 1, 1], [], []>} : vector<16x16xf32>, vector<16x16xf32>, vector<16x16xf32> -> vector<16x16xf32>
    %cst_20 = arith.constant 0.000000e+00 : f32
    %52 = vector.broadcast %cst_20 : f32 to vector<16x16xf32>
    %53 = arith.maximumf %51, %52 : vector<16x16xf32>
    %54 = tpu.concatenate %16, %53 in 1 : vector<16x16xf32>, vector<16x16xf32> -> vector<16x32xf32>
    %cst_21 = arith.constant dense<0.000000e+00> : vector<16x16xf32>
    %55 = tpu.matmul %54, %6, %cst_21 {dimension_numbers = #tpu.dot_dimension_numbers<[1], [0], [0], [1], [0, 0, 1, 1], [], []>} : vector<16x32xf32>, vector<32x16xf32>, vector<16x16xf32> -> vector<16x16xf32>
    %56 = vector.broadcast %9 : vector<1x16xf32> to vector<16x16xf32>
    %57 = arith.addf %55, %56 : vector<16x16xf32>
    %cst_22 = arith.constant 0.000000e+00 : f32
    %58 = vector.broadcast %cst_22 : f32 to vector<16x16xf32>
    %59 = arith.maximumf %57, %58 : vector<16x16xf32>
    %cst_23 = arith.constant dense<0.000000e+00> : vector<16x16xf32>
    %60 = tpu.matmul %59, %7, %cst_23 {dimension_numbers = #tpu.dot_dimension_numbers<[1], [0], [0], [1], [0, 0, 1, 1], [], []>} : vector<16x16xf32>, vector<16x16xf32>, vector<16x16xf32> -> vector<16x16xf32>
    %61 = vector.broadcast %10 : vector<1x16xf32> to vector<16x16xf32>
    %62 = arith.addf %60, %61 : vector<16x16xf32>
    %63 = vector.extract_strided_slice %62 {offsets = [0, 0], sizes = [16, 8], strides = [1, 1]} : vector<16x16xf32> to vector<16x8xf32>
    %64 = vector.extract_strided_slice %62 {offsets = [0, 8], sizes = [16, 8], strides = [1, 1]} : vector<16x16xf32> to vector<16x8xf32>
    %cst_24 = arith.constant 5.000000e-01 : f32
    %65 = vector.broadcast %cst_24 : f32 to vector<16x8xf32>
    %66 = arith.mulf %65, %64 : vector<16x8xf32>
    %67 = math.exp %66 : vector<16x8xf32>
    %68 = arith.mulf %4, %67 : vector<16x8xf32>
    %69 = arith.addf %63, %68 : vector<16x8xf32>
    %cst_25 = arith.constant 0.000000e+00 : f32
    %70 = vector.broadcast %cst_25 : f32 to vector<16x104xf32>
    %71 = tpu.concatenate %69, %62, %70 in 1 : vector<16x8xf32>, vector<16x16xf32>, vector<16x104xf32> -> vector<16x128xf32>
    %c0_26 = arith.constant 0 : index
    %c0_27 = arith.constant 0 : index
    %c0_28 = arith.constant 0 : index
    %72 = vector.load %arg4[%c0_26, %c0_27, %c0_28] : memref<1x16x128xf32, #tpu.memory_space<vmem>>, vector<1x16x128xf32>
    %73 = vector.shape_cast %72 : vector<1x16x128xf32> to vector<16x128xf32>
    %74 = vector.shape_cast %71 : vector<16x128xf32> to vector<1x16x128xf32>
    tpu.vector_store %arg4[%c0_26, %c0_27, %c0_28], %74 {strides = array<i32>} : memref<1x16x128xf32, #tpu.memory_space<vmem>>, vector<1x16x128xf32>,
    return
  }
  func.func @transform_0(%arg0: i32) -> (i32, i32, i32) {
    %c0_i32 = arith.constant 0 : i32
    %c0_i32_0 = arith.constant 0 : i32
    %c0_i32_1 = arith.constant 0 : i32
    return %arg0, %c0_i32, %c0_i32_0 : i32, i32, i32
  }
  func.func @transform_1(%arg0: i32) -> (i32, i32) {
    %c0_i32 = arith.constant 0 : i32
    %c0_i32_0 = arith.constant 0 : i32
    %c0_i32_1 = arith.constant 0 : i32
    return %c0_i32, %c0_i32_0 : i32, i32
  }
  func.func @transform_2(%arg0: i32) -> (i32, i32) {
    %c0_i32 = arith.constant 0 : i32
    %c0_i32_0 = arith.constant 0 : i32
    %c0_i32_1 = arith.constant 0 : i32
    return %c0_i32, %c0_i32_0 : i32, i32
  }
  func.func @transform_3(%arg0: i32) -> (i32, i32, i32) {
    %c0_i32 = arith.constant 0 : i32
    %c0_i32_0 = arith.constant 0 : i32
    %c0_i32_1 = arith.constant 0 : i32
    return %arg0, %c0_i32, %c0_i32_0 : i32, i32, i32
  }
}

</mosaic_0001>

<llo_original>
// kernel: tpu_custom_call.1
$region0: #{tpu_custom_call.1}
  #allocation0 [shape = 'u32[]', space=smem, size = 0x4, offset = 0x4, fixed_abs, tag = 'smem constant byte address 0x4 - core index']
  #allocation1 [shape = 'u32[144,128]{1,0:T(1,128)}', space=vmem, size = 0x12000, scoped, tag = 'internal scratch']
  %s0 = inlined_call_operand.hbm [shape: f32[2,16,384], index: 0, kind: input, shape index: {}]
  %s1 = inlined_call_operand.hbm [shape: f32[64,384], index: 1, kind: input, shape index: {}]
  %s2 = inlined_call_operand.hbm [shape: f32[8,128], index: 2, kind: input, shape index: {}]
  %s3 = inlined_call_operand.hbm [shape: f32[2,16,128], index: 3, kind: output, shape index: {}]
  %s4 = sld [smem:[#allocation0]]
  $region57: #{tpu_custom_call.1} parent=0
    _
  %s6 = ssub.s32 1, %s4
  %s7 = scalar_select 0, %s6, %s4
  $region1: #{tpu_custom_call.1} parent=0
    #allocation2 [shape = 'u8[49152]{0}', space=vmem, size = 0xc000, scoped, tag = 'input window, operand 0']
    #allocation3 [shape = 's32[2]{0}', space=sflag, size = 0x8, scoped, tag = 'scoped memory for tpu_custom_call.1']
    #allocation4 [shape = 's32[2]{0}', space=sflag, size = 0x8, scoped, tag = 'scoped memory for tpu_custom_call.1']
    #allocation5 [shape = 'u8[98304]{0}', space=vmem, size = 0x18000, scoped, tag = 'input window, operand 1, single buffered']
    #allocation6 [shape = 's32[1]{0}', space=sflag, size = 0x4, scoped, tag = 'scoped memory for tpu_custom_call.1']
    #allocation7 [shape = 'u8[4096]{0}', space=vmem, size = 0x1000, scoped, tag = 'input window, operand 2, single buffered']
    #allocation8 [shape = 'u8[16384]{0}', space=vmem, size = 0x4000, scoped, tag = 'output window, operand 0']
    %8 = vsyncpa [#allocation3], 0
    %s9 = scalar_lea.sflag [#allocation3], 1
    %10 = vsyncpa %s9, 0
    %11 = vsyncpa [#allocation6], 0
    %12 = vsyncpa [#allocation4], 0
    %s13 = scalar_lea.sflag [#allocation4], 1
    %14 = vsyncpa %s13, 0
    loop: start=0, step=1, limit=4
    $region2: #{tpu_custom_call.1} parent=1 // loop_pre_header
      _
    $region3: #{tpu_custom_call.1} parent=1 // loop_header
      %s16 = sphi 0, %s20
      %p17 = scmp.ge.s32.totalorder %s16, 4
      %s26 = sphi 0, %s28
      %s29 = sphi 0, %s26
      %s30 = sphi 0, %s29
      %s46 = sphi 0, %s30
      %s50 = sphi 0, %s50
      %s52 = sphi 0, %s50
      %s53 = sphi 0, %s52
      %s67 = sphi 0, %s53
      %s71 = sphi 0, %s71
      %s73 = sphi 0, %s71
      %s74 = sphi 0, %s73
      %s88 = sphi 0, %s74
      %s94 = sphi 0, %s96
      %s97 = sphi 0, %s94
      %s98 = sphi 0, %s97
      %s114 = sphi 0, %s98
    $region4: #{tpu_custom_call.1} parent=1 // loop_header_branch
      %19 = sbr.rel (%p17) target = $region8
    $region5: #{tpu_custom_call.1} parent=1 // loop_body
      %s21 = ssub.s32 %s16, 1
      %s22 = ssub.s32 %s16, 2
      %s23 = sadd.s32 %s16, 1
      %s24 = ssub.s32 %s16, %s23
      %p25 = scmp.eq.s32.totalorder %s24, 0
      %s27 = sadd.s32 %s26, 1
      %s28 = scalar_select %p25, %s26, %s27
      %p31 = pneg %p25
      %p32 = scmp.eq.s32.totalorder %s16, 1
      %p33 = por %p31, %p32
      %p34 = scmp.ne.s32.totalorder %s26, %s29
      %p35 = scmp.eq.s32.totalorder %s16, 0
      %p36 = por %p34, %p35
      %p37 = scmp.ne.s32.totalorder %s26, %s29
      %p38 = scmp.eq.s32.totalorder %s21, 1
      %p39 = por %p37, %p38
      %p40 = scmp.ne.s32.totalorder %s29, %s30
      %p41 = scmp.eq.s32.totalorder %s21, 0
      %p42 = por %p40, %p41
      %p43 = scmp.ne.s32.totalorder %s29, %s30
      %p44 = scmp.eq.s32.totalorder %s22, 1
      %p45 = por %p43, %p44
      %p47 = scmp.ne.s32.totalorder %s30, %s46
      %p48 = scmp.eq.s32.totalorder %s22, 0
      %p49 = por %p47, %p48
      %s51 = sadd.s32 %s50, 1
      %p54 = scmp.eq.s32.totalorder %s16, 1
      %p55 = scmp.ne.s32.totalorder %s50, %s52
      %p56 = scmp.eq.s32.totalorder %s16, 0
      %p57 = por %p55, %p56
      %p58 = scmp.ne.s32.totalorder %s50, %s52
      %p59 = scmp.eq.s32.totalorder %s21, 1
      %p60 = por %p58, %p59
      %p61 = scmp.ne.s32.totalorder %s52, %s53
      %p62 = scmp.eq.s32.totalorder %s21, 0
      %p63 = por %p61, %p62
      %p64 = scmp.ne.s32.totalorder %s52, %s53
      %p65 = scmp.eq.s32.totalorder %s22, 1
      %p66 = por %p64, %p65
      %p68 = scmp.ne.s32.totalorder %s53, %s67
      %p69 = scmp.eq.s32.totalorder %s22, 0
      %p70 = por %p68, %p69
      %s72 = sadd.s32 %s71, 1
      %p75 = scmp.eq.s32.totalorder %s16, 1
      %p76 = scmp.ne.s32.totalorder %s71, %s73
      %p77 = scmp.eq.s32.totalorder %s16, 0
      %p78 = por %p76, %p77
      %p79 = scmp.ne.s32.totalorder %s71, %s73
      %p80 = scmp.eq.s32.totalorder %s21, 1
      %p81 = por %p79, %p80
      %p82 = scmp.ne.s32.totalorder %s73, %s74
      %p83 = scmp.eq.s32.totalorder %s21, 0
      %p84 = por %p82, %p83
      %p85 = scmp.ne.s32.totalorder %s73, %s74
      %p86 = scmp.eq.s32.totalorder %s22, 1
      %p87 = por %p85, %p86
      %p89 = scmp.ne.s32.totalorder %s74, %s88
      %p90 = scmp.eq.s32.totalorder %s22, 0
      %p91 = por %p89, %p90
      %s92 = ssub.s32 %s16, %s23
      %p93 = scmp.eq.s32.totalorder %s92, 0
      %s95 = sadd.s32 %s94, 1
      %s96 = scalar_select %p93, %s94, %s95
      %p99 = pneg %p93
      %p100 = scmp.eq.s32.totalorder %s16, 1
      %p101 = por %p99, %p100
      %p102 = scmp.ne.s32.totalorder %s94, %s97
      %p103 = scmp.eq.s32.totalorder %s16, 0
      %p104 = por %p102, %p103
      %p105 = scmp.ne.s32.totalorder %s94, %s97
      %p106 = scmp.eq.s32.totalorder %s21, 1
      %p107 = por %p105, %p106
      %p108 = scmp.ne.s32.totalorder %s97, %s98
      %p109 = scmp.eq.s32.totalorder %s21, 0
      %p110 = por %p108, %p109
      %p111 = scmp.ne.s32.totalorder %s97, %s98
      %p112 = scmp.eq.s32.totalorder %s22, 1
      %p113 = por %p111, %p112
      %p115 = scmp.ne.s32.totalorder %s98, %s114
      %p116 = scmp.eq.s32.totalorder %s22, 0
      %p117 = por %p115, %p116
      %p118 = scmp.le.s32.totalorder 1, %s16
      %p119 = scmp.lt.s32.totalorder %s16, 3
      %p120 = pnand %p118, %p119
      %p121 = pneg %p120
      // Predicated region
      $region9: #{tpu_custom_call.1} parent=5 // pred_check
        _
      $region10: #{tpu_custom_call.1} parent=5 // pred_check_branch
        %123 = sbr.rel (%p120) target = $region12
      $region11: #{tpu_custom_call.1} parent=5 // pred_region
        %s124 = ssub.s32 %s16, 1
        // Predicated region
        $region13: #{tpu_custom_call.1} parent=11 // pred_check
          %p125 = pneg %p63
        $region14: #{tpu_custom_call.1} parent=11 // pred_check_branch
          %127 = sbr.rel (%p125) target = $region16
        $region15: #{tpu_custom_call.1} parent=11 // pred_region
          %s129 = ssub.s32 3072, 3072
          %130 = vsyncadd [#allocation6], %s129
          %s131 = sshll.u32 [#allocation5], 4
          %s132 = int_to_ptr.vmem [resolvable:$true] %s131
          %137 = dma.hbm_to_vmem [thread:$0]  %s1, 3072, %s132, [#allocation6], 384, 384, 24
        $region16: #{tpu_custom_call.1} parent=11 // pred_fallthru
          _
        // Predicated region
        $region17: #{tpu_custom_call.1} parent=11 // pred_check
          %p138 = pneg %p84
        $region18: #{tpu_custom_call.1} parent=11 // pred_check_branch
          %140 = sbr.rel (%p138) target = $region20
        $region19: #{tpu_custom_call.1} parent=11 // pred_region
          %s142 = ssub.s32 128, 128
          %143 = vsyncadd [#allocation6], %s142
          %s145 = sshll.u32 [#allocation7], 4
          %s146 = int_to_ptr.vmem [resolvable:$true] %s145
          %148 = dma.hbm_to_vmem [thread:$0]  %s2, 128, %s146, [#allocation6]
        $region20: #{tpu_custom_call.1} parent=11 // pred_fallthru
          _
      $region12: #{tpu_custom_call.1} parent=5 // pred_fallthru
        _
      %p149 = scmp.lt.s32.totalorder %s16, 2
      // Predicated region
      $region21: #{tpu_custom_call.1} parent=5 // pred_check
        %p150 = pneg %p149
      $region22: #{tpu_custom_call.1} parent=5 // pred_check_branch
        %152 = sbr.rel (%p150) target = $region24
      $region23: #{tpu_custom_call.1} parent=5 // pred_region
        // Predicated region
        $region25: #{tpu_custom_call.1} parent=23 // pred_check
          %p153 = pneg %p36
        $region26: #{tpu_custom_call.1} parent=23 // pred_check_branch
          %155 = sbr.rel (%p153) target = $region28
        $region27: #{tpu_custom_call.1} parent=23 // pred_region
          %s156 = sand.u32 %s26, 1
          %s157 = scalar_lea.sflag [#allocation3], %s156
          %s158 = sand.u32 %s26, 1
          %s159 = smul.addr %s158, 48
          %s160 = scalar_lea.vmem [#allocation2], %s159
          %s162 = ssub.s32 768, 768
          %163 = vsyncadd %s157, %s162
          %s164 = smul.addr %s16, 6
          %s165 = smul.addr %s164, 128
          %s166 = scalar_lea.hbm %s0, %s165
          %s167 = sshll.u32 %s160, 4
          %s168 = int_to_ptr.vmem [resolvable:$true] %s167
          %173 = dma.hbm_to_vmem [thread:$0]  %s166, 768, %s168, %s157, 384, 384, 24
        $region28: #{tpu_custom_call.1} parent=23 // pred_fallthru
          _
      $region24: #{tpu_custom_call.1} parent=5 // pred_fallthru
        _
      %p174 = scmp.le.s32.totalorder 1, %s16
      %p175 = scmp.lt.s32.totalorder %s16, 3
      %p176 = pnand %p174, %p175
      %p177 = pneg %p176
      // Predicated region
      $region29: #{tpu_custom_call.1} parent=5 // pred_check
        _
      $region30: #{tpu_custom_call.1} parent=5 // pred_check_branch
        %179 = sbr.rel (%p176) target = $region32
      $region31: #{tpu_custom_call.1} parent=5 // pred_region
        %s180 = ssub.s32 %s16, 1
        %s181 = sand.u32 %s29, 1
        %s182 = scalar_lea.sflag [#allocation3], %s181
        %s183 = sand.u32 %s29, 1
        %s184 = smul.addr %s183, 48
        %s185 = scalar_lea.vmem [#allocation2], %s184
        // Predicated region
        $region33: #{tpu_custom_call.1} parent=31 // pred_check
          %p186 = pneg %p42
        $region34: #{tpu_custom_call.1} parent=31 // pred_check_branch
          %188 = sbr.rel (%p186) target = $region36
        $region35: #{tpu_custom_call.1} parent=31 // pred_region
          %189 = dma.done %s182, 768
        $region36: #{tpu_custom_call.1} parent=31 // pred_fallthru
          _
        // Predicated region
        $region37: #{tpu_custom_call.1} parent=31 // pred_check
          %p190 = pneg %p63
        $region38: #{tpu_custom_call.1} parent=31 // pred_check_branch
          %192 = sbr.rel (%p190) target = $region40
        $region39: #{tpu_custom_call.1} parent=31 // pred_region
          %193 = dma.done [#allocation6], 3072
        $region40: #{tpu_custom_call.1} parent=31 // pred_fallthru
          _
        // Predicated region
        $region41: #{tpu_custom_call.1} parent=31 // pred_check
          %p194 = pneg %p84
        $region42: #{tpu_custom_call.1} parent=31 // pred_check_branch
          %196 = sbr.rel (%p194) target = $region44
        $region43: #{tpu_custom_call.1} parent=31 // pred_region
          %197 = dma.done [#allocation6], 128
        $region44: #{tpu_custom_call.1} parent=31 // pred_fallthru
          _
        %s198 = sand.u32 %s29, 1
        %s199 = scalar_lea.sflag [#allocation3], %s198
        %s200 = sand.u32 %s29, 1
        %s201 = smul.addr %s200, 48
        %s202 = scalar_lea.vmem [#allocation2], %s201
        %p203 = pneg %p42
        %p204 = pneg %p39
        %p205 = pneg %p63
        %p206 = pneg %p60
        %p207 = pneg %p84
        %p208 = pneg %p81
        %p209 = pneg %p110
        %p210 = pneg %p107
        %s211 = sand.u32 %s97, 1
        %s212 = scalar_lea.sflag [#allocation4], %s211
        %s213 = sand.u32 %s97, 1
        %s214 = smul.addr %s213, 16
        %s215 = scalar_lea.vmem [#allocation8], %s214
        %v216 = vld [vmem:[%s185] sm:$0xff]
        %v217 = vld [vmem:[%s185 + $0x8] sm:$0xff]
        %v218 = vld [vmem:[%s185 + $0x10] sm:$0xff]
        %v219 = vld [vmem:[%s185 + $0x18] sm:$0xff]
        %v220 = vld [vmem:[%s185 + $0x20] sm:$0xff]
        %v221 = vld [vmem:[%s185 + $0x28] sm:$0xff]
        %v222 = vld [vmem:[#allocation5] sm:$0xff]
        %v223 = vld [vmem:[#allocation5 + $0x18] sm:$0xff]
        %v224 = vld [vmem:[#allocation5 + $0x30] sm:$0xff]
        %v225 = vld [vmem:[#allocation5 + $0x48] sm:$0xff]
        %v226 = vld [vmem:[#allocation5 + $0x60] sm:$0xff]
        %v227 = vld [vmem:[#allocation5 + $0x78] sm:$0xff]
        %v228 = vld [vmem:[#allocation5 + $0x90] sm:$0xff]
        %v229 = vld [vmem:[#allocation5 + $0xa8] sm:$0xff]
        %v230 = vld [vmem:[#allocation5 + $0x8] sm:$0xff]
        %v231 = vld [vmem:[#allocation5 + $0x20] sm:$0xff]
        %v232 = vld [vmem:[#allocation5 + $0x38] sm:$0xff]
        %v233 = vld [vmem:[#allocation5 + $0x50] sm:$0xff]
        %v234 = vld [vmem:[#allocation5 + $0x10] sm:$0xff]
        %v235 = vld [vmem:[#allocation5 + $0x28] sm:$0xff]
        %v236 = vld [vmem:[#allocation7] sm:$0x1]
        %v237 = vld [vmem:[#allocation7 + $0x1] sm:$0x1]
        %v238 = vld [vmem:[#allocation7 + $0x2] sm:$0x1]
        %vm239 = vcmask 523264
        %v241 = vsel %vm239, %v216, 0
        %v244 = vsel %vm239, %v219, 0
        %246 = vmatprep.subr.mxu0 0.0
        %247 = vmatpush1.msra.mxu0 0.0
        %248 = vmatprep.subr.mxu0 0.0
        %249 = vmatpush1.msra.mxu0 0.0
        %250 = vmatprep.subr.mxu0 0.0
        %251 = vmatpush1.msra.mxu0 0.0
        %252 = vmatprep.subr.mxu0 0.0
        %253 = vmatpush1.msra.mxu0 0.0
        %254 = vmatprep.subr.mxu0 0.0
        %255 = vmatpush1.msra.mxu0 0.0
        %256 = vmatprep.subr.mxu0 0.0
        %257 = vmatpush1.msra.mxu0 0.0
        %258 = vmatprep.subr.mxu0 0.0
        %259 = vmatpush1.msra.mxu0 0.0
        %260 = vmatprep.subr.mxu0 0.0
        %261 = vmatpush1.msra.mxu0 0.0
        %262 = vmatprep.subr.mxu0 0.0
        %263 = vmatpush1.msra.mxu0 %v229
        %264 = vmatprep.subr.mxu0 0.0
        %265 = vmatpush1.msra.mxu0 %v228
        %266 = vmatprep.subr.mxu0 0.0
        %267 = vmatpush1.msra.mxu0 %v227
        %268 = vmatprep.subr.mxu0 0.0
        %269 = vmatpush1.msra.mxu0 %v226
        %270 = vmatprep.subr.mxu0 0.0
        %271 = vmatpush1.msra.mxu0 %v225
        %272 = vmatprep.subr.mxu0 0.0
        %273 = vmatpush1.msra.mxu0 %v224
        %274 = vmatprep.subr.mxu0 0.0
        %275 = vmatpush1.msra.mxu0 %v223
        %276 = vmatprep.subr.mxu0 0.0
        %277 = vmatpush1.msra.mxu0 %v222
        %278 = vmatprep.subr.mxu0 0.0
        %279 = vmatpush2.msra.mxu0 0.0
        %280 = vmatprep.subr.mxu0 0.0
        %281 = vmatpush2.msra.mxu0 0.0
        %282 = vmatprep.subr.mxu0 0.0
        %283 = vmatpush2.msra.mxu0 0.0
        %284 = vmatprep.subr.mxu0 0.0
        %285 = vmatpush2.msra.mxu0 0.0
        %286 = vmatprep.subr.mxu0 0.0
        %287 = vmatpush2.msra.mxu0 0.0
        %288 = vmatprep.subr.mxu0 0.0
        %289 = vmatpush2.msra.mxu0 0.0
        %290 = vmatprep.subr.mxu0 0.0
        %291 = vmatpush2.msra.mxu0 0.0
        %292 = vmatprep.subr.mxu0 0.0
        %293 = vmatpush2.msra.mxu0 0.0
        %294 = vmatprep.subr.mxu0 0.0
        %295 = vmatpush2.msra.mxu0 0.0
        %296 = vmatprep.subr.mxu0 0.0
        %297 = vmatpush2.msra.mxu0 0.0
        %298 = vmatprep.subr.mxu0 0.0
        %299 = vmatpush2.msra.mxu0 0.0
        %300 = vmatprep.subr.mxu0 0.0
        %301 = vmatpush2.msra.mxu0 0.0
        %302 = vmatprep.subr.mxu0 0.0
        %303 = vmatpush2.msra.mxu0 0.0
        %304 = vmatprep.subr.mxu0 0.0
        %305 = vmatpush2.msra.mxu0 0.0
        %306 = vmatprep.subr.mxu0 0.0
        %307 = vmatpush2.msra.mxu0 0.0
        %308 = vmatprep.subr.mxu0 0.0
        %309 = vmatpush2.msra.mxu0 0.0
        %310 = vmatprep.mubr.f32.mxu0 0.0
        %311 = vmatmul.mubr.f32.gmra.mxu0 %v241
        %v312 = vpop.f32.mrf.mxu0
        %v313 = vadd.f32 0.0, %v312
        %v314 = vpop.f32.mrf.mxu0
        %315 = vmatprep.mubr.f32.mxu0 0.0
        %316 = vmatmul.mubr.f32.gmra.mxu0 %v244
        %v317 = vpop.f32.mrf.mxu0
        %v318 = vadd.f32 0.0, %v317
        %v319 = vpop.f32.mrf.mxu0
        %320 = vdwg.mxu0
        %v321 = vlaneseq
        %v322 = vshrl.u32 %v321, 7
        %v323 = vsub.s32 0, %v322
        %v324 = vrot.slane %v236, %v323
        %v325 = vadd.f32 %v313, %v324
        %v326 = vadd.f32 %v318, %v324
        %v327 = vmax.f32 %v325, 0.0
        %v328 = vmax.f32 %v326, 0.0
        %v329 = vlaneseq
        %v330 = vshrl.u32 %v329, 7
        %v331 = vadd.s32 %v330, 8
        %v332 = vlaneseq
        %v333 = vand.u32 %v332, 127
        %vm334 = vcmp.eq.s32.totalorder %v330, %v333
        %vm335 = vcmp.eq.s32.totalorder %v331, %v333
        %337 = vset.pattern.permute.xlu0 33
        %338 = vperm.xlu0 %337, %v313
        %v339 = vpop.permute.xlu0 %338
        %342 = vset.pattern.permute.xlu0 33
        %343 = vperm.xlu0 %342, %v318
        %v344 = vpop.permute.xlu0 %343
        %v346 = vsel %vm334, %v339, 0.0
        %v347 = vsel %vm335, %v344, 0.0
        %vm348 = vcmask 130048
        %v349 = vsel %vm348, %v346, 0.0
        %v350 = vsel %vm348, %v347, 0.0
        %v351 = vadd.f32 %v349, %v350
        %v352 = vrot.slane %v351, 4
        %v353 = vadd.f32 %v351, %v352
        %v354 = vrot.slane %v353, 2
        %v355 = vadd.f32 %v353, %v354
        %v356 = vrot.slane %v355, 1
        %v357 = vadd.f32 %v355, %v356
        %358 = vset.pattern.permute.xlu0 32
        %359 = vperm.xlu0 %358, %v313
        %v360 = vpop.permute.xlu0 %359
        %362 = vset.pattern.permute.xlu0 32
        %363 = vperm.xlu0 %362, %v318
        %v364 = vpop.permute.xlu0 %363
        %v366 = vadd.f32 %v360, %v357
        %v367 = vadd.f32 %v364, %v357
        %vm368 = vcmp.gt.f32.partialorder %v366, 0.0
        %vm369 = vcmp.gt.f32.partialorder %v367, 0.0
        %v370 = vmul.f32 %v366, 0.2
        %v371 = vmul.f32 %v367, 0.2
        %v372 = vsel %vm368, %v366, %v370
        %v373 = vsel %vm369, %v367, %v371
        %vm374 = vcmp.ne.f32.partialorder %v217, 0.0
        %vm375 = vcmp.ne.f32.partialorder %v220, 0.0
        %v376 = vsel %vm374, %v372, 0.0
        %v377 = vsel %vm375, %v373, 0.0
        %v378 = vsel %vm348, %v376, -inf
        %379 = vmax.xlane.f32.xlu0 %v378
        %v380 = vpop.xlane.xlu0 %379
        %v381 = vsel %vm348, %v377, -inf
        %382 = vmax.xlane.f32.xlu0 %v381
        %v383 = vpop.xlane.xlu0 %382
        %v384 = vsub.f32 %v376, %v380
        %v385 = vsub.f32 %v377, %v383
        %v386 = vmul.f32 %v384, 1.442695
        %v387 = vpow.pop %v386
        %v388 = vmul.f32 %v385, 1.442695
        %v389 = vpow.pop %v388
        %v390 = vsel %vm348, %v387, 0.0
        %391 = vadd.xlane.f32.xlu0 %v390
        %v392 = vpop.xlane.xlu0 %391
        %v393 = vsel %vm348, %v389, 0.0
        %394 = vadd.xlane.f32.xlu0 %v393
        %v395 = vpop.xlane.xlu0 %394
        %v396 = vrcp.pop %v392
        %v397 = vrcp.pop %v395
        %v398 = vmul.f32 %v387, %v396
        %v399 = vmul.f32 %v389, %v397
        %400 = vrot.lane.b32.xlu0 %v313, 112
        %v401 = vpop.permute.xlu0 %400
        %402 = vrot.lane.b32.xlu0 %v318, 112
        %v403 = vpop.permute.xlu0 %402
        %v407 = vsel %vm348, %v398, 0
        %v410 = vsel %vm348, %v399, 0
        %412 = vmatprep.subr.mxu0 0.0
        %413 = vmatpush1.msra.mxu0 0.0
        %414 = vmatprep.subr.mxu0 0.0
        %415 = vmatpush1.msra.mxu0 0.0
        %416 = vmatprep.subr.mxu0 0.0
        %417 = vmatpush1.msra.mxu0 0.0
        %418 = vmatprep.subr.mxu0 0.0
        %419 = vmatpush1.msra.mxu0 0.0
        %420 = vmatprep.subr.mxu0 0.0
        %421 = vmatpush1.msra.mxu0 0.0
        %422 = vmatprep.subr.mxu0 0.0
        %423 = vmatpush1.msra.mxu0 0.0
        %424 = vmatprep.subr.mxu0 0.0
        %425 = vmatpush1.msra.mxu0 0.0
        %426 = vmatprep.subr.mxu0 0.0
        %427 = vmatpush1.msra.mxu0 0.0
        %428 = vmatprep.subr.mxu0 0.0
        %429 = vmatpush1.msra.mxu0 0.0
        %430 = vmatprep.subr.mxu0 0.0
        %431 = vmatpush1.msra.mxu0 0.0
        %432 = vmatprep.subr.mxu0 0.0
        %433 = vmatpush1.msra.mxu0 0.0
        %434 = vmatprep.subr.mxu0 0.0
        %435 = vmatpush1.msra.mxu0 0.0
        %436 = vmatprep.subr.mxu0 0.0
        %437 = vmatpush1.msra.mxu0 0.0
        %438 = vmatprep.subr.mxu0 0.0
        %439 = vmatpush1.msra.mxu0 0.0
        %440 = vmatprep.subr.mxu0 0.0
        %441 = vmatpush1.msra.mxu0 %v403
        %442 = vmatprep.subr.mxu0 0.0
        %443 = vmatpush1.msra.mxu0 %v401
        %444 = vmatprep.subr.mxu0 0.0
        %445 = vmatpush2.msra.mxu0 0.0
        %446 = vmatprep.subr.mxu0 0.0
        %447 = vmatpush2.msra.mxu0 0.0
        %448 = vmatprep.subr.mxu0 0.0
        %449 = vmatpush2.msra.mxu0 0.0
        %450 = vmatprep.subr.mxu0 0.0
        %451 = vmatpush2.msra.mxu0 0.0
        %452 = vmatprep.subr.mxu0 0.0
        %453 = vmatpush2.msra.mxu0 0.0
        %454 = vmatprep.subr.mxu0 0.0
        %455 = vmatpush2.msra.mxu0 0.0
        %456 = vmatprep.subr.mxu0 0.0
        %457 = vmatpush2.msra.mxu0 0.0
        %458 = vmatprep.subr.mxu0 0.0
        %459 = vmatpush2.msra.mxu0 0.0
        %460 = vmatprep.subr.mxu0 0.0
        %461 = vmatpush2.msra.mxu0 0.0
        %462 = vmatprep.subr.mxu0 0.0
        %463 = vmatpush2.msra.mxu0 0.0
        %464 = vmatprep.subr.mxu0 0.0
        %465 = vmatpush2.msra.mxu0 0.0
        %466 = vmatprep.subr.mxu0 0.0
        %467 = vmatpush2.msra.mxu0 0.0
        %468 = vmatprep.subr.mxu0 0.0
        %469 = vmatpush2.msra.mxu0 0.0
        %470 = vmatprep.subr.mxu0 0.0
        %471 = vmatpush2.msra.mxu0 0.0
        %472 = vmatprep.subr.mxu0 0.0
        %473 = vmatpush2.msra.mxu0 0.0
        %474 = vmatprep.subr.mxu0 0.0
        %475 = vmatpush2.msra.mxu0 0.0
        %476 = vmatprep.mubr.f32.mxu0 0.0
        %477 = vmatmul.mubr.f32.gmra.mxu0 %v407
        %v478 = vpop.f32.mrf.mxu0
        %v479 = vadd.f32 0.0, %v478
        %v480 = vpop.f32.mrf.mxu0
        %481 = vmatprep.mubr.f32.mxu0 0.0
        %482 = vmatmul.mubr.f32.gmra.mxu0 %v410
        %v483 = vpop.f32.mrf.mxu0
        %v484 = vadd.f32 0.0, %v483
        %v485 = vpop.f32.mrf.mxu0
        %486 = vdwg.mxu0
        %v487 = vmax.f32 %v479, 0.0
        %v488 = vmax.f32 %v484, 0.0
        %491 = vrot.lane.b32.xlu0 %v487, 16
        %v492 = vpop.permute.xlu0 %491
        %493 = vrot.lane.b32.xlu0 %v488, 16
        %v494 = vpop.permute.xlu0 %493
        %v497 = vsel %vm348, %v327, %v492
        %v498 = vsel %vm348, %v328, %v494
        %v499 = vlaneseq
        %v500 = vshrl.u32 %v499, 7
        %v501 = vsub.s32 0, %v500
        %v502 = vrot.slane %v237, %v501
        %vm503 = vcmask 261120
        %v505 = vsel %vm503, %v497, 0
        %v508 = vsel %vm503, %v498, 0
        %510 = vmatprep.subr.mxu0 0.0
        %511 = vmatpush1.msra.mxu0 0.0
        %512 = vmatprep.subr.mxu0 0.0
        %513 = vmatpush1.msra.mxu0 0.0
        %514 = vmatprep.subr.mxu0 0.0
        %515 = vmatpush1.msra.mxu0 0.0
        %516 = vmatprep.subr.mxu0 0.0
        %517 = vmatpush1.msra.mxu0 0.0
        %518 = vmatprep.subr.mxu0 0.0
        %519 = vmatpush1.msra.mxu0 0.0
        %520 = vmatprep.subr.mxu0 0.0
        %521 = vmatpush1.msra.mxu0 0.0
        %522 = vmatprep.subr.mxu0 0.0
        %523 = vmatpush1.msra.mxu0 0.0
        %524 = vmatprep.subr.mxu0 0.0
        %525 = vmatpush1.msra.mxu0 0.0
        %526 = vmatprep.subr.mxu0 0.0
        %527 = vmatpush1.msra.mxu0 0.0
        %528 = vmatprep.subr.mxu0 0.0
        %529 = vmatpush1.msra.mxu0 0.0
        %530 = vmatprep.subr.mxu0 0.0
        %531 = vmatpush1.msra.mxu0 0.0
        %532 = vmatprep.subr.mxu0 0.0
        %533 = vmatpush1.msra.mxu0 0.0
        %534 = vmatprep.subr.mxu0 0.0
        %535 = vmatpush1.msra.mxu0 %v233
        %536 = vmatprep.subr.mxu0 0.0
        %537 = vmatpush1.msra.mxu0 %v232
        %538 = vmatprep.subr.mxu0 0.0
        %539 = vmatpush1.msra.mxu0 %v231
        %540 = vmatprep.subr.mxu0 0.0
        %541 = vmatpush1.msra.mxu0 %v230
        %542 = vmatprep.subr.mxu0 0.0
        %543 = vmatpush2.msra.mxu0 0.0
        %544 = vmatprep.subr.mxu0 0.0
        %545 = vmatpush2.msra.mxu0 0.0
        %546 = vmatprep.subr.mxu0 0.0
        %547 = vmatpush2.msra.mxu0 0.0
        %548 = vmatprep.subr.mxu0 0.0
        %549 = vmatpush2.msra.mxu0 0.0
        %550 = vmatprep.subr.mxu0 0.0
        %551 = vmatpush2.msra.mxu0 0.0
        %552 = vmatprep.subr.mxu0 0.0
        %553 = vmatpush2.msra.mxu0 0.0
        %554 = vmatprep.subr.mxu0 0.0
        %555 = vmatpush2.msra.mxu0 0.0
        %556 = vmatprep.subr.mxu0 0.0
        %557 = vmatpush2.msra.mxu0 0.0
        %558 = vmatprep.subr.mxu0 0.0
        %559 = vmatpush2.msra.mxu0 0.0
        %560 = vmatprep.subr.mxu0 0.0
        %561 = vmatpush2.msra.mxu0 0.0
        %562 = vmatprep.subr.mxu0 0.0
        %563 = vmatpush2.msra.mxu0 0.0
        %564 = vmatprep.subr.mxu0 0.0
        %565 = vmatpush2.msra.mxu0 0.0
        %566 = vmatprep.subr.mxu0 0.0
        %567 = vmatpush2.msra.mxu0 0.0
        %568 = vmatprep.subr.mxu0 0.0
        %569 = vmatpush2.msra.mxu0 0.0
        %570 = vmatprep.subr.mxu0 0.0
        %571 = vmatpush2.msra.mxu0 0.0
        %572 = vmatprep.subr.mxu0 0.0
        %573 = vmatpush2.msra.mxu0 0.0
        %574 = vmatprep.mubr.f32.mxu0 0.0
        %575 = vmatmul.mubr.f32.gmra.mxu0 %v505
        %v576 = vpop.f32.mrf.mxu0
        %v577 = vadd.f32 %v502, %v576
        %v578 = vpop.f32.mrf.mxu0
        %579 = vmatprep.mubr.f32.mxu0 0.0
        %580 = vmatmul.mubr.f32.gmra.mxu0 %v508
        %v581 = vpop.f32.mrf.mxu0
        %v582 = vadd.f32 %v502, %v581
        %v583 = vpop.f32.mrf.mxu0
        %584 = vdwg.mxu0
        %v585 = vmax.f32 %v577, 0.0
        %v586 = vmax.f32 %v582, 0.0
        %v587 = vlaneseq
        %v588 = vshrl.u32 %v587, 7
        %v589 = vsub.s32 0, %v588
        %v590 = vrot.slane %v238, %v589
        %v592 = vsel %vm348, %v585, 0
        %v595 = vsel %vm348, %v586, 0
        %597 = vmatprep.subr.mxu0 0.0
        %598 = vmatpush1.msra.mxu0 0.0
        %599 = vmatprep.subr.mxu0 0.0
        %600 = vmatpush1.msra.mxu0 0.0
        %601 = vmatprep.subr.mxu0 0.0
        %602 = vmatpush1.msra.mxu0 0.0
        %603 = vmatprep.subr.mxu0 0.0
        %604 = vmatpush1.msra.mxu0 0.0
        %605 = vmatprep.subr.mxu0 0.0
        %606 = vmatpush1.msra.mxu0 0.0
        %607 = vmatprep.subr.mxu0 0.0
        %608 = vmatpush1.msra.mxu0 0.0
        %609 = vmatprep.subr.mxu0 0.0
        %610 = vmatpush1.msra.mxu0 0.0
        %611 = vmatprep.subr.mxu0 0.0
        %612 = vmatpush1.msra.mxu0 0.0
        %613 = vmatprep.subr.mxu0 0.0
        %614 = vmatpush1.msra.mxu0 0.0
        %615 = vmatprep.subr.mxu0 0.0
        %616 = vmatpush1.msra.mxu0 0.0
        %617 = vmatprep.subr.mxu0 0.0
        %618 = vmatpush1.msra.mxu0 0.0
        %619 = vmatprep.subr.mxu0 0.0
        %620 = vmatpush1.msra.mxu0 0.0
        %621 = vmatprep.subr.mxu0 0.0
        %622 = vmatpush1.msra.mxu0 0.0
        %623 = vmatprep.subr.mxu0 0.0
        %624 = vmatpush1.msra.mxu0 0.0
        %625 = vmatprep.subr.mxu0 0.0
        %626 = vmatpush1.msra.mxu0 %v235
        %627 = vmatprep.subr.mxu0 0.0
        %628 = vmatpush1.msra.mxu0 %v234
        %629 = vmatprep.subr.mxu0 0.0
        %630 = vmatpush2.msra.mxu0 0.0
        %631 = vmatprep.subr.mxu0 0.0
        %632 = vmatpush2.msra.mxu0 0.0
        %633 = vmatprep.subr.mxu0 0.0
        %634 = vmatpush2.msra.mxu0 0.0
        %635 = vmatprep.subr.mxu0 0.0
        %636 = vmatpush2.msra.mxu0 0.0
        %637 = vmatprep.subr.mxu0 0.0
        %638 = vmatpush2.msra.mxu0 0.0
        %639 = vmatprep.subr.mxu0 0.0
        %640 = vmatpush2.msra.mxu0 0.0
        %641 = vmatprep.subr.mxu0 0.0
        %642 = vmatpush2.msra.mxu0 0.0
        %643 = vmatprep.subr.mxu0 0.0
        %644 = vmatpush2.msra.mxu0 0.0
        %645 = vmatprep.subr.mxu0 0.0
        %646 = vmatpush2.msra.mxu0 0.0
        %647 = vmatprep.subr.mxu0 0.0
        %648 = vmatpush2.msra.mxu0 0.0
        %649 = vmatprep.subr.mxu0 0.0
        %650 = vmatpush2.msra.mxu0 0.0
        %651 = vmatprep.subr.mxu0 0.0
        %652 = vmatpush2.msra.mxu0 0.0
        %653 = vmatprep.subr.mxu0 0.0
        %654 = vmatpush2.msra.mxu0 0.0
        %655 = vmatprep.subr.mxu0 0.0
        %656 = vmatpush2.msra.mxu0 0.0
        %657 = vmatprep.subr.mxu0 0.0
        %658 = vmatpush2.msra.mxu0 0.0
        %659 = vmatprep.subr.mxu0 0.0
        %660 = vmatpush2.msra.mxu0 0.0
        %661 = vmatprep.mubr.f32.mxu0 0.0
        %662 = vmatmul.mubr.f32.gmra.mxu0 %v592
        %v663 = vpop.f32.mrf.mxu0
        %v664 = vadd.f32 %v590, %v663
        %v665 = vpop.f32.mrf.mxu0
        %666 = vmatprep.mubr.f32.mxu0 0.0
        %667 = vmatmul.mubr.f32.gmra.mxu0 %v595
        %v668 = vpop.f32.mrf.mxu0
        %v669 = vadd.f32 %v590, %v668
        %v670 = vpop.f32.mrf.mxu0
        %671 = vdwg.mxu0
        %v672 = vmul.f32 %v664, 0.5
        %v673 = vmul.f32 %v669, 0.5
        %v674 = vmul.f32 %v672, 1.442695
        %v675 = vpow.pop %v674
        %v676 = vmul.f32 %v673, 1.442695
        %v677 = vpow.pop %v676
        %680 = vrot.lane.b32.xlu0 %v675, 120
        %v681 = vpop.permute.xlu0 %680
        %682 = vrot.lane.b32.xlu0 %v677, 120
        %v683 = vpop.permute.xlu0 %682
        %v686 = vmul.f32 %v218, %v681
        %v687 = vmul.f32 %v221, %v683
        %v688 = vadd.f32 %v664, %v686
        %v689 = vadd.f32 %v669, %v687
        %692 = vrot.lane.b32.xlu0 %v664, 8
        %v693 = vpop.permute.xlu0 %692
        %694 = vrot.lane.b32.xlu0 %v669, 8
        %v695 = vpop.permute.xlu0 %694
        %vm698 = vcmask 64512
        %v699 = vsel %vm698, %v688, %v693
        %v700 = vsel %vm698, %v689, %v695
        %vm701 = vcmask 195584
        %v702 = vsel %vm701, %v699, 0.0
        %v703 = vsel %vm701, %v700, 0.0
        %704 = vst [vmem:[%s215] sm:$0xff] %v702
        %705 = vst [vmem:[%s215 + $0x8] sm:$0xff] %v703
        %s706 = sand.u32 %s97, 1
        %s707 = scalar_lea.sflag [#allocation4], %s706
        %s708 = sand.u32 %s97, 1
        %s709 = smul.addr %s708, 16
        %s710 = scalar_lea.vmem [#allocation8], %s709
        // Predicated region
        $region45: #{tpu_custom_call.1} parent=31 // pred_check
          %p711 = pneg %p107
        $region46: #{tpu_custom_call.1} parent=31 // pred_check_branch
          %713 = sbr.rel (%p711) target = $region48
        $region47: #{tpu_custom_call.1} parent=31 // pred_region
          %s715 = ssub.s32 256, 256
          %716 = vsyncadd %s707, %s715
          %s717 = smul.addr %s21, 2
          %s718 = smul.addr %s717, 128
          %s719 = scalar_lea.hbm %s3, %s718
          %s720 = sshll.u32 %s710, 4
          %s721 = int_to_ptr.vmem [resolvable:$true] %s720
          %726 = dma.vmem_to_hbm [thread:$0]  %s721, 256, %s719, %s707, 128, 128, 8
        $region48: #{tpu_custom_call.1} parent=31 // pred_fallthru
          _
      $region32: #{tpu_custom_call.1} parent=5 // pred_fallthru
        _
      %p727 = scmp.le.s32.totalorder 2, %s16
      // Predicated region
      $region49: #{tpu_custom_call.1} parent=5 // pred_check
        %p728 = pneg %p727
      $region50: #{tpu_custom_call.1} parent=5 // pred_check_branch
        %730 = sbr.rel (%p728) target = $region52
      $region51: #{tpu_custom_call.1} parent=5 // pred_region
        %s731 = ssub.s32 %s16, 2
        // Predicated region
        $region53: #{tpu_custom_call.1} parent=51 // pred_check
          %p732 = pneg %p113
        $region54: #{tpu_custom_call.1} parent=51 // pred_check_branch
          %734 = sbr.rel (%p732) target = $region56
        $region55: #{tpu_custom_call.1} parent=51 // pred_region
          %s735 = sand.u32 %s98, 1
          %s736 = scalar_lea.sflag [#allocation4], %s735
          %s737 = sand.u32 %s98, 1
          %s738 = smul.addr %s737, 16
          %s739 = scalar_lea.vmem [#allocation8], %s738
          %740 = dma.done %s736, 256
        $region56: #{tpu_custom_call.1} parent=51 // pred_fallthru
          _
      $region52: #{tpu_custom_call.1} parent=5 // pred_fallthru
        _
    $region6: #{tpu_custom_call.1} parent=1 // loop_footer
      %s20 = sadd.s32 1, %s16
    $region7: #{tpu_custom_call.1} parent=1 // loop_footer_branch
      %15 = sbr.rel target = $region3
    $region8: #{tpu_custom_call.1} parent=1 // loop_exit
      _
    %741 = vsyncpa [#allocation3], 1
    %s742 = scalar_lea.sflag [#allocation3], 1
    %743 = vsyncpa %s742, 1
    %744 = vsyncpa [#allocation6], 1
    %745 = vsyncpa [#allocation4], 1
    %s746 = scalar_lea.sflag [#allocation4], 1
    %747 = vsyncpa %s746, 1

</llo_original>
